<compile_context>
chip_gen: v5e
topology: v5e:2x2
jax: 0.10.0
libtpu: 0.0.40
codegen_flags: <defaults>
</compile_context>

<pallas_src>
import functools

import jax
import jax.numpy as jnp
from jax import lax
from jax.experimental import pallas as pl
from jax.experimental.pallas import tpu as pltpu


_LANE = 128
_SUBLANE = 8
_MAX_ROW_TILE = 512               # safe on v5e/v6e/v7x at these feature dims
_VMEM_LIMIT = 32 * 1024 * 1024    # explicit scoped-VMEM limit (v5e default 16 MiB)
_NEG_BIG = -1e30                  # bias for padded class lanes -> exp() == 0


def _round_up(x, m):
    return ((x + m - 1) // m) * m


# ---------------------------------------------------------------------------
# Pass 1: fc3 + per-feature sum / sum-of-squares accumulation (BatchNorm stats)
# ---------------------------------------------------------------------------
def _stats_kernel(x_ref, w3_ref, b3_ref, sum_ref, sumsq_ref, *, n_valid, row_tile):
    i = pl.program_id(0)

    @pl.when(i == 0)
    def _():
        sum_ref[...] = jnp.zeros_like(sum_ref)
        sumsq_ref[...] = jnp.zeros_like(sumsq_ref)

    h = jnp.dot(x_ref[...], w3_ref[...],
                preferred_element_type=jnp.float32) + b3_ref[...]

    # Mask rows that only exist because N was padded up to a tile multiple.
    row = i * row_tile + lax.broadcasted_iota(jnp.int32, h.shape, 0)
    h = jnp.where(row < n_valid, h, 0.0)

    sum_ref[...] += jnp.sum(h, axis=0, keepdims=True)
    sumsq_ref[...] += jnp.sum(h * h, axis=0, keepdims=True)


# ---------------------------------------------------------------------------
# Pass 2: fc3 -> BN (folded affine) -> ReLU -> fc_final -> softmax -> log
# ---------------------------------------------------------------------------
def _fwd_kernel(x_ref, w3_ref, b3_ref, scale_ref, shift_ref, wf_ref, bf_ref,
                *out_refs, with_softmax):
    h = jnp.dot(x_ref[...], w3_ref[...],
                preferred_element_type=jnp.float32) + b3_ref[...]
    h = h * scale_ref[...] + shift_ref[...]          # folded BatchNorm
    h = jnp.maximum(h, 0.0)                          # ReLU

    logits = jnp.dot(h, wf_ref[...],
                     preferred_element_type=jnp.float32) + bf_ref[...]

    # Numerically stable softmax over the (lane-padded) class axis.  Padded
    # lanes carry a -1e30 bias so exp() underflows to exactly 0 and they do
    # not contribute to the max or the denominator.
    m = jnp.max(logits, axis=1, keepdims=True)
    e = jnp.exp(logits - m)
    denom = jnp.sum(e, axis=1, keepdims=True)
    # Exact reciprocal keeps softmax row-sums within 1e-5 of 1.
    sm = e * pl.reciprocal(denom, approx=False)

    out_refs[0][...] = jnp.log(sm + 1e-4)
    if with_softmax:
        out_refs[1][...] = sm


# ---------------------------------------------------------------------------
# Wrapper
# ---------------------------------------------------------------------------
def prednet_forward(x, params, return_softmax=False):
    """Pallas implementation of PredNet.forward (training-mode BatchNorm).

    x: (T, B, nh) or (N, nh) float32.  Weights are stored transposed relative
    to PyTorch (W has shape [in_features, out_features]).
    """
    re = x.ndim == 3
    if re:
        T, B, _ = x.shape
        x2 = x.reshape(T * B, -1)
    else:
        x2 = x
    x2 = x2.astype(jnp.float32)

    N, nin = x2.shape
    w3 = params["w3"].astype(jnp.float32)        # (nin, nh)
    b3 = params["b3"].astype(jnp.float32)        # (1, nh)
    gamma = params["gamma"].astype(jnp.float32)  # (1, nh)
    beta = params["beta"].astype(jnp.float32)    # (1, nh)
    wf = params["wf"].astype(jnp.float32)        # (nh, nc)
    bf = params["bf"].astype(jnp.float32)        # (1, nc)
    nh = w3.shape[1]
    nc = wf.shape[1]

    # ---- row tiling: pipelined (and megacore-parallel in pass 2) ----
    if N <= _MAX_ROW_TILE:
        row_tile = _round_up(max(N, 1), _SUBLANE)
    else:
        row_tile = _MAX_ROW_TILE
    n_pad = _round_up(N, row_tile)
    x_p = jnp.pad(x2, ((0, n_pad - N), (0, 0))) if n_pad != N else x2
    num_tiles = n_pad // row_tile

    # ---- lane-dense class dim: pad nc up to a multiple of 128 lanes ----
    ncp = _round_up(max(nc, _LANE), _LANE)
    wf_p = jnp.zeros((nh, ncp), jnp.float32).at[:, :nc].set(wf)
    bf_p = jnp.full((1, ncp), _NEG_BIG, jnp.float32).at[:, :nc].set(bf)

    resident = lambda shape: pl.BlockSpec(shape, lambda i: (0, 0))   # DMA'd once
    rows = lambda cols: pl.BlockSpec((row_tile, cols), lambda i: (i, 0))

    # ---- pass 1: batch statistics (per-feature sum and sum of squares) ----
    h_sum, h_sumsq = pl.pallas_call(
        functools.partial(_stats_kernel, n_valid=N, row_tile=row_tile),
        out_shape=(jax.ShapeDtypeStruct((1, nh), jnp.float32),
                   jax.ShapeDtypeStruct((1, nh), jnp.float32)),
        grid=(num_tiles,),
        in_specs=[rows(nin), resident((nin, nh)), resident((1, nh))],
        out_specs=(resident((1, nh)), resident((1, nh))),
        compiler_params=pltpu.CompilerParams(
            dimension_semantics=("arbitrary",),      # reduction over row tiles
            vmem_limit_bytes=_VMEM_LIMIT),
    )(x_p, w3, b3)

    # Fold BatchNorm into a single per-feature scale/shift (tiny 1 x nh math).
    n_f = jnp.float32(N)
    mean = h_sum / n_f
    var = jnp.maximum(h_sumsq / n_f - mean * mean, 0.0)   # biased variance
    scale = gamma * lax.rsqrt(var + 1e-5)
    shift = beta - mean * scale

    # ---- pass 2: full forward, streaming row tiles ----
    out_shape = [jax.ShapeDtypeStruct((n_pad, ncp), jnp.float32)]
    out_specs = [rows(ncp)]
    if return_softmax:
        out_shape.append(jax.ShapeDtypeStruct((n_pad, ncp), jnp.float32))
        out_specs.append(rows(ncp))

    outs = pl.pallas_call(
        functools.partial(_fwd_kernel, with_softmax=return_softmax),
        out_shape=tuple(out_shape),
        grid=(num_tiles,),
        in_specs=[rows(nin),
                  resident((nin, nh)), resident((1, nh)),
                  resident((1, nh)), resident((1, nh)),
                  resident((nh, ncp)), resident((1, ncp))],
        out_specs=tuple(out_specs),
        compiler_params=pltpu.CompilerParams(
            dimension_semantics=("parallel",),       # independent row tiles
            vmem_limit_bytes=_VMEM_LIMIT),
    )(x_p, w3, b3, scale, shift, wf_p, bf_p)

    log_x = outs[0][:N, :nc]
    if re:
        log_x = log_x.reshape(T, B, nc)
    if return_softmax:
        sm = outs[1][:N, :nc]
        if re:
            sm = sm.reshape(T, B, nc)
        return log_x, sm
    return log_x


# ---------------------------------------------------------------------------
# Pure-JAX reference (matches the PyTorch module in training mode)
# ---------------------------------------------------------------------------
def prednet_reference(x, params):
    re = x.ndim == 3
    if re:
        T, B, _ = x.shape
        x2 = x.reshape(T * B, -1)
    else:
        x2 = x
    x2 = x2.astype(jnp.float32)
    h = jnp.dot(x2, params["w3"], precision=lax.Precision.HIGHEST) + params["b3"]
    mean = jnp.mean(h, axis=0, keepdims=True)
    var = jnp.mean((h - mean) ** 2, axis=0, keepdims=True)
    h = (h - mean) * lax.rsqrt(var + 1e-5) * params["gamma"] + params["beta"]
    h = jnp.maximum(h, 0.0)
    logits = jnp.dot(h, params["wf"], precision=lax.Precision.HIGHEST) + params["bf"]
    sm = jax.nn.softmax(logits, axis=1)
    log_x = jnp.log(sm + 1e-4)
    if re:
        log_x = log_x.reshape(T, B, -1)
        sm = sm.reshape(T, B, -1)
    return log_x, sm


def init_params(key, nh, nc):
    """Deterministic init mimicking nn.Linear defaults (U[-1/sqrt(fan_in), +])."""
    k1, k2, k3, k4 = jax.random.split(key, 4)
    bound3 = 1.0 / jnp.sqrt(nh)
    boundf = 1.0 / jnp.sqrt(nh)
    return {
        "w3": jax.random.uniform(k1, (nh, nh), jnp.float32, -bound3, bound3),
        "b3": jax.random.uniform(k2, (1, nh), jnp.float32, -bound3, bound3),
        "gamma": jnp.ones((1, nh), jnp.float32),
        "beta": jnp.zeros((1, nh), jnp.float32),
        "wf": jax.random.uniform(k3, (nh, nc), jnp.float32, -boundf, boundf),
        "bf": jax.random.uniform(k4, (1, nc), jnp.float32, -boundf, boundf),
    }


if __name__ == "__main__":
    key = jax.random.PRNGKey(0)
    kx, kp = jax.random.split(key)

    T, B, nh, nc = 8, 2, 32, 10
    x = jax.random.normal(kx, (T, B, nh), dtype=jnp.float32)
    params = init_params(kp, nh, nc)

    log_x, x_softmax = prednet_forward(x, params, return_softmax=True)
    log_only = prednet_forward(x, params, return_softmax=False)
    jax.block_until_ready((log_x, x_softmax, log_only))

    assert log_x.shape == (T, B, nc)
    assert x_softmax.shape == (T, B, nc)
    assert log_only.shape == (T, B, nc)
    assert bool(jnp.all(jnp.isfinite(log_x)))
    # softmax rows must sum to ~1 (padded lanes contribute exactly 0)
    assert bool(jnp.allclose(jnp.sum(x_softmax, axis=-1), 1.0, atol=1e-5))
    # single-output variant must agree with the two-output variant
    assert bool(jnp.allclose(log_only, log_x, atol=1e-5))

    # correctness vs pure-JAX reference (training-mode BN, biased variance)
    ref_log, ref_sm = prednet_reference(x, params)
    assert bool(jnp.allclose(x_softmax, ref_sm, atol=2e-3, rtol=1e-3))
    assert bool(jnp.allclose(log_x, ref_log, atol=2e-2, rtol=1e-2))

    print("KERNEL_OK")
</pallas_src>

<mosaic_0001>
module attributes {stable_mosaic.version = 11 : i64} {
  func.func @_stats_kernel(%arg0: i32, %arg1: memref<16x32xf32, #tpu.memory_space<vmem>>, %arg2: memref<32x32xf32, #tpu.memory_space<vmem>>, %arg3: memref<1x32xf32, #tpu.memory_space<vmem>>, %arg4: memref<1x32xf32, #tpu.memory_space<vmem>>, %arg5: memref<1x32xf32, #tpu.memory_space<vmem>>) attributes {dimension_semantics = [#tpu.dimension_semantics<arbitrary>], iteration_bounds = array<i64: 1>, scalar_prefetch = 0 : i64, scratch_operands = 0 : i64, tpu.core_type = #tpu.core_type<tc>, window_params = [{transform_indices = @transform_0, window_bounds = array<i64: 16, 32>}, {pipeline_mode = #tpu.pipeline_mode<synchronous>, transform_indices = @transform_1, window_bounds = array<i64: 32, 32>}, {pipeline_mode = #tpu.pipeline_mode<synchronous>, transform_indices = @transform_2, window_bounds = array<i64: 1, 32>}, {pipeline_mode = #tpu.pipeline_mode<synchronous>, transform_indices = @transform_3, window_bounds = array<i64: 1, 32>}, {pipeline_mode = #tpu.pipeline_mode<synchronous>, transform_indices = @transform_4, window_bounds = array<i64: 1, 32>}]} {
    %c0_i32 = arith.constant 0 : i32
    %0 = arith.cmpi eq, %arg0, %c0_i32 : i32
    %1 = arith.extui %0 : i1 to i32
    %c0_i32_0 = arith.constant 0 : i32
    %2 = arith.cmpi ne, %1, %c0_i32_0 : i32
    scf.if %2 {
      %cst_18 = arith.constant 0.000000e+00 : f32
      %28 = vector.broadcast %cst_18 : f32 to vector<1x32xf32>
      %c0_19 = arith.constant 0 : index
      %c0_20 = arith.constant 0 : index
      %29 = vector.load %arg4[%c0_19, %c0_20] : memref<1x32xf32, #tpu.memory_space<vmem>>, vector<1x32xf32>
      tpu.vector_store %arg4[%c0_19, %c0_20], %28 {strides = array<i32>} : memref<1x32xf32, #tpu.memory_space<vmem>>, vector<1x32xf32>,
      %cst_21 = arith.constant 0.000000e+00 : f32
      %30 = vector.broadcast %cst_21 : f32 to vector<1x32xf32>
      %c0_22 = arith.constant 0 : index
      %c0_23 = arith.constant 0 : index
      %31 = vector.load %arg5[%c0_22, %c0_23] : memref<1x32xf32, #tpu.memory_space<vmem>>, vector<1x32xf32>
      tpu.vector_store %arg5[%c0_22, %c0_23], %30 {strides = array<i32>} : memref<1x32xf32, #tpu.memory_space<vmem>>, vector<1x32xf32>,
    } else {
    }
    %c0 = arith.constant 0 : index
    %c0_1 = arith.constant 0 : index
    %3 = vector.load %arg1[%c0, %c0_1] : memref<16x32xf32, #tpu.memory_space<vmem>>, vector<16x32xf32>
    %c0_2 = arith.constant 0 : index
    %c0_3 = arith.constant 0 : index
    %4 = vector.load %arg2[%c0_2, %c0_3] : memref<32x32xf32, #tpu.memory_space<vmem>>, vector<32x32xf32>
    %cst = arith.constant dense<0.000000e+00> : vector<16x32xf32>
    %5 = tpu.matmul %3, %4, %cst {dimension_numbers = #tpu.dot_dimension_numbers<[1], [0], [0], [1], [0, 0, 1, 1], [], []>} : vector<16x32xf32>, vector<32x32xf32>, vector<16x32xf32> -> vector<16x32xf32>
    %c0_4 = arith.constant 0 : index
    %c0_5 = arith.constant 0 : index
    %6 = vector.load %arg3[%c0_4, %c0_5] : memref<1x32xf32, #tpu.memory_space<vmem>>, vector<1x32xf32>
    %7 = vector.broadcast %6 : vector<1x32xf32> to vector<16x32xf32>
    %8 = arith.addf %5, %7 : vector<16x32xf32>
    %c16_i32 = arith.constant 16 : i32
    %9 = arith.muli %arg0, %c16_i32 : i32
    %10 = tpu.iota {dimensions = array<i32: 0>} : vector<16x32xi32>
    %11 = vector.broadcast %9 : i32 to vector<16x32xi32>
    %12 = arith.addi %11, %10 : vector<16x32xi32>
    %c16_i32_6 = arith.constant 16 : i32
    %13 = vector.broadcast %c16_i32_6 : i32 to vector<16x32xi32>
    %14 = arith.cmpi slt, %12, %13 : vector<16x32xi32>
    %cst_7 = arith.constant 0.000000e+00 : f32
    %15 = vector.broadcast %cst_7 : f32 to vector<16x32xf32>
    %16 = arith.select %14, %8, %15 : vector<16x32xi1>, vector<16x32xf32>
    %c0_8 = arith.constant 0 : index
    %c0_9 = arith.constant 0 : index
    %17 = vector.load %arg4[%c0_8, %c0_9] : memref<1x32xf32, #tpu.memory_space<vmem>>, vector<1x32xf32>
    %cst_10 = arith.constant dense<0.000000e+00> : vector<32xf32>
    %18 = vector.multi_reduction <add>, %16, %cst_10 [0] : vector<16x32xf32> to vector<32xf32>
    %19 = vector.shape_cast %18 : vector<32xf32> to vector<1x32xf32>
    %20 = arith.addf %17, %19 : vector<1x32xf32>
    %c0_11 = arith.constant 0 : index
    %c0_12 = arith.constant 0 : index
    %21 = vector.load %arg4[%c0_11, %c0_12] : memref<1x32xf32, #tpu.memory_space<vmem>>, vector<1x32xf32>
    tpu.vector_store %arg4[%c0_11, %c0_12], %20 {strides = array<i32>} : memref<1x32xf32, #tpu.memory_space<vmem>>, vector<1x32xf32>,
    %c0_13 = arith.constant 0 : index
    %c0_14 = arith.constant 0 : index
    %22 = vector.load %arg5[%c0_13, %c0_14] : memref<1x32xf32, #tpu.memory_space<vmem>>, vector<1x32xf32>
    %23 = arith.mulf %16, %16 : vector<16x32xf32>
    %cst_15 = arith.constant dense<0.000000e+00> : vector<32xf32>
    %24 = vector.multi_reduction <add>, %23, %cst_15 [0] : vector<16x32xf32> to vector<32xf32>
    %25 = vector.shape_cast %24 : vector<32xf32> to vector<1x32xf32>
    %26 = arith.addf %22, %25 : vector<1x32xf32>
    %c0_16 = arith.constant 0 : index
    %c0_17 = arith.constant 0 : index
    %27 = vector.load %arg5[%c0_16, %c0_17] : memref<1x32xf32, #tpu.memory_space<vmem>>, vector<1x32xf32>
    tpu.vector_store %arg5[%c0_16, %c0_17], %26 {strides = array<i32>} : memref<1x32xf32, #tpu.memory_space<vmem>>, vector<1x32xf32>,
    return
  }
  func.func @transform_0(%arg0: i32) -> (i32, i32) {
    %c0_i32 = arith.constant 0 : i32
    %c0_i32_0 = arith.constant 0 : i32
    return %arg0, %c0_i32 : i32, i32
  }
  func.func @transform_1(%arg0: i32) -> (i32, i32) {
    %c0_i32 = arith.constant 0 : i32
    %c0_i32_0 = arith.constant 0 : i32
    %c0_i32_1 = arith.constant 0 : i32
    return %c0_i32, %c0_i32_0 : i32, i32
  }
  func.func @transform_2(%arg0: i32) -> (i32, i32) {
    %c0_i32 = arith.constant 0 : i32
    %c0_i32_0 = arith.constant 0 : i32
    %c0_i32_1 = arith.constant 0 : i32
    return %c0_i32, %c0_i32_0 : i32, i32
  }
  func.func @transform_3(%arg0: i32) -> (i32, i32) {
    %c0_i32 = arith.constant 0 : i32
    %c0_i32_0 = arith.constant 0 : i32
    %c0_i32_1 = arith.constant 0 : i32
    return %c0_i32, %c0_i32_0 : i32, i32
  }
  func.func @transform_4(%arg0: i32) -> (i32, i32) {
    %c0_i32 = arith.constant 0 : i32
    %c0_i32_0 = arith.constant 0 : i32
    %c0_i32_1 = arith.constant 0 : i32
    return %c0_i32, %c0_i32_0 : i32, i32
  }
}

</mosaic_0001>

<llo_original>
// kernel: tpu_custom_call.1
$region0: #{tpu_custom_call.1}
  #allocation0 [shape = 'u32[]', space=smem, size = 0x4, offset = 0x4, fixed_abs, tag = 'smem constant byte address 0x4 - core index']
  #allocation1 [shape = 'u32[72,128]{1,0:T(1,128)}', space=vmem, size = 0x9000, scoped, tag = 'internal scratch']
  %s0 = inlined_call_operand.hbm [shape: f32[16,32], index: 0, kind: input, shape index: {}]
  %s1 = inlined_call_operand.hbm [shape: f32[32,32], index: 1, kind: input, shape index: {}]
  %s2 = inlined_call_operand.vmem [shape: f32[1,32], index: 2, kind: input, shape index: {}]
  %s3 = inlined_call_operand.hbm [shape: f32[1,32], index: 3, kind: output, shape index: {0}]
  %s4 = inlined_call_operand.hbm [shape: f32[1,32], index: 4, kind: output, shape index: {1}]
  %5 = xla_tuple %s3, %s4
  %s6 = sld [smem:[#allocation0]]
  $region42: #{tpu_custom_call.1} parent=0
    _
  %s8 = ssub.s32 1, %s6
  %s9 = scalar_select 0, %s8, %s6
  $region1: #{tpu_custom_call.1} parent=0
    #allocation2 [shape = 'u8[8192]{0}', space=vmem, size = 0x2000, scoped, tag = 'input window, operand 0, single buffered']
    #allocation3 [shape = 's32[1]{0}', space=sflag, size = 0x4, scoped, tag = 'scoped memory for tpu_custom_call.1']
    #allocation4 [shape = 's32[1]{0}', space=sflag, size = 0x4, scoped, tag = 'scoped memory for tpu_custom_call.1']
    #allocation5 [shape = 'u8[16384]{0}', space=vmem, size = 0x4000, scoped, tag = 'input window, operand 1, single buffered']
    #allocation6 [shape = 's32[1]{0}', space=sflag, size = 0x4, scoped, tag = 'scoped memory for tpu_custom_call.1']
    #allocation7 [shape = 'u8[512]{0}', space=vmem, size = 0x400, scoped, tag = 'output window, operand 0, single buffered']
    #allocation8 [shape = 'u8[512]{0}', space=vmem, size = 0x400, scoped, tag = 'output window, operand 1, single buffered']
    #allocation9 [shape = 's32[1]{0}', space=sflag, size = 0x4, scoped, tag = 'scoped memory for tpu_custom_call.1']
    %10 = vsyncpa [#allocation3], 0
    %11 = vsyncpa [#allocation6], 0
    %12 = vsyncpa [#allocation4], 0
    %13 = vsyncpa [#allocation9], 0
    // Predicated region
    $region2: #{tpu_custom_call.1} parent=1 // pred_check
      _
    $region3: #{tpu_custom_call.1} parent=1 // pred_check_branch
      %15 = sbr.rel (0) target = $region5
    $region4: #{tpu_custom_call.1} parent=1 // pred_region
      %17 = vsyncadd [#allocation3], 0
      %s18 = sshll.u32 %s0, 4
      %s19 = int_to_ptr.hbm [resolvable:$true] %s18
      %s20 = sshll.u32 [#allocation2], 4
      %s21 = int_to_ptr.vmem [resolvable:$true] %s20
      %26 = dma.hbm_to_vmem [thread:$0]  %s19, 256, %s21, [#allocation3], 128, 128, 8
    $region5: #{tpu_custom_call.1} parent=1 // pred_fallthru
      _
    // Predicated region
    $region6: #{tpu_custom_call.1} parent=1 // pred_check
      _
    $region7: #{tpu_custom_call.1} parent=1 // pred_check_branch
      %28 = sbr.rel (0) target = $region9
    $region8: #{tpu_custom_call.1} parent=1 // pred_region
      %30 = vsyncadd [#allocation6], 0
      %s31 = sshll.u32 %s1, 4
      %s32 = int_to_ptr.hbm [resolvable:$true] %s31
      %s33 = sshll.u32 [#allocation5], 4
      %s34 = int_to_ptr.vmem [resolvable:$true] %s33
      %39 = dma.hbm_to_vmem [thread:$0]  %s32, 512, %s34, [#allocation6], 128, 128, 8
    $region9: #{tpu_custom_call.1} parent=1 // pred_fallthru
      _
    // Predicated region
    $region10: #{tpu_custom_call.1} parent=1 // pred_check
      _
    $region11: #{tpu_custom_call.1} parent=1 // pred_check_branch
      %41 = sbr.rel (0) target = $region13
    $region12: #{tpu_custom_call.1} parent=1 // pred_region
      _
    $region13: #{tpu_custom_call.1} parent=1 // pred_fallthru
      _
    // Predicated region
    $region14: #{tpu_custom_call.1} parent=1 // pred_check
      _
    $region15: #{tpu_custom_call.1} parent=1 // pred_check_branch
      %43 = sbr.rel (0) target = $region17
    $region16: #{tpu_custom_call.1} parent=1 // pred_region
      %45 = dma.done [#allocation3], 256
    $region17: #{tpu_custom_call.1} parent=1 // pred_fallthru
      _
    // Predicated region
    $region18: #{tpu_custom_call.1} parent=1 // pred_check
      _
    $region19: #{tpu_custom_call.1} parent=1 // pred_check_branch
      %47 = sbr.rel (0) target = $region21
    $region20: #{tpu_custom_call.1} parent=1 // pred_region
      %49 = dma.done [#allocation6], 512
    $region21: #{tpu_custom_call.1} parent=1 // pred_fallthru
      _
    %p50 = scmp.eq.s32.totalorder 0, 0
    // Predicated region
    $region22: #{tpu_custom_call.1} parent=1 // pred_check
      %p51 = pneg %p50
    $region23: #{tpu_custom_call.1} parent=1 // pred_check_branch
      %53 = sbr.rel (%p51) target = $region25
    $region24: #{tpu_custom_call.1} parent=1 // pred_region
      %vm54 = vcmask 253952
      %55 = vst.msk [vmem:[#allocation7] sm:$0x1] %vm54, 0.0
      %56 = vst.msk [vmem:[#allocation8] sm:$0x1] %vm54, 0.0
    $region25: #{tpu_custom_call.1} parent=1 // pred_fallthru
      _
    %v57 = vld [vmem:[#allocation2] sm:$0xff]
    %v58 = vld [vmem:[#allocation2 + $0x8] sm:$0xff]
    %v59 = vld [vmem:[#allocation5] sm:$0xff]
    %v60 = vld [vmem:[#allocation5 + $0x8] sm:$0xff]
    %v61 = vld [vmem:[#allocation5 + $0x10] sm:$0xff]
    %v62 = vld [vmem:[#allocation5 + $0x18] sm:$0xff]
    %v63 = vld [vmem:[%s2] sm:$0x1]
    %v65 = vperm.slane %v63, 0
    %vm67 = vcmask 261120
    %v69 = vsel %vm67, %v57, 0
    %v72 = vsel %vm67, %v58, 0
    %74 = vmatpush.msra.mxu0 0.0
    %75 = vmatpush.msra.mxu0 0.0
    %76 = vmatpush.msra.mxu0 0.0
    %77 = vmatpush.msra.mxu0 0.0
    %78 = vmatpush.msra.mxu0 0.0
    %79 = vmatpush.msra.mxu0 0.0
    %80 = vmatpush.msra.mxu0 0.0
    %81 = vmatpush.msra.mxu0 0.0
    %82 = vmatpush.msra.mxu0 0.0
    %83 = vmatpush.msra.mxu0 0.0
    %84 = vmatpush.msra.mxu0 0.0
    %85 = vmatpush.msra.mxu0 0.0
    %86 = vmatpush.msra.mxu0 %v62
    %87 = vmatpush.msra.mxu0 %v61
    %88 = vmatpush.msra.mxu0 %v60
    %89 = vmatpush.msra.mxu0 %v59
    %90 = vmatmul.f32.gmra.mxu0 %v69
    %v91 = vpop.f32.mrf.mxu0
    %v92 = vadd.f32 %v65, %v91
    %93 = vmatmul.f32.gmra.mxu0 %v72
    %v94 = vpop.f32.mrf.mxu0
    %v95 = vadd.f32 %v65, %v94
    %96 = vdwg.mxu0
    %s97 = smul.u32 0, 16
    %v98 = vlaneseq
    %v99 = vshrl.u32 %v98, 7
    %v100 = vadd.s32 %v99, 8
    %v101 = vstv %s97
    %v102 = vadd.s32 %v101, %v99
    %v103 = vadd.s32 %v101, %v100
    %vm104 = vcmp.lt.s32.totalorder %v102, 16
    %vm105 = vcmp.lt.s32.totalorder %v103, 16
    %v106 = vsel %vm104, %v92, 0.0
    %v107 = vsel %vm105, %v95, 0.0
    %v108 = vld [vmem:[#allocation7] sm:$0x1]
    %v109 = vsel %vm67, %v106, 0.0
    %v110 = vsel %vm67, %v107, 0.0
    %v111 = vadd.f32 %v109, %v110
    %v112 = vrot.slane %v111, 4
    %v113 = vadd.f32 %v111, %v112
    %v114 = vrot.slane %v113, 2
    %v115 = vadd.f32 %v113, %v114
    %v116 = vrot.slane %v115, 1
    %v117 = vadd.f32 %v115, %v116
    %v118 = vadd.f32 %v108, %v117
    %vm119 = vcmask 253952
    %120 = vst.msk [vmem:[#allocation7] sm:$0x1] %vm119, %v118
    %v121 = vld [vmem:[#allocation8] sm:$0x1]
    %v122 = vmul.f32 %v106, %v106
    %v123 = vmul.f32 %v107, %v107
    %v124 = vsel %vm67, %v122, 0.0
    %v125 = vsel %vm67, %v123, 0.0
    %v126 = vadd.f32 %v124, %v125
    %v127 = vrot.slane %v126, 4
    %v128 = vadd.f32 %v126, %v127
    %v129 = vrot.slane %v128, 2
    %v130 = vadd.f32 %v128, %v129
    %v131 = vrot.slane %v130, 1
    %v132 = vadd.f32 %v130, %v131
    %v133 = vadd.f32 %v121, %v132
    %134 = vst.msk [vmem:[#allocation8] sm:$0x1] %vm119, %v133
    // Predicated region
    $region26: #{tpu_custom_call.1} parent=1 // pred_check
      _
    $region27: #{tpu_custom_call.1} parent=1 // pred_check_branch
      %136 = sbr.rel (0) target = $region29
    $region28: #{tpu_custom_call.1} parent=1 // pred_region
      %138 = vsyncadd [#allocation4], 0
      %s140 = sshll.u32 [#allocation7], 4
      %s141 = int_to_ptr.vmem [resolvable:$true] %s140
      %s142 = sshll.u32 %s3, 4
      %s143 = int_to_ptr.hbm [resolvable:$true] %s142
      %145 = dma.vmem_to_hbm [thread:$0]  %s141, 16, %s143, [#allocation4]
    $region29: #{tpu_custom_call.1} parent=1 // pred_fallthru
      _
    // Predicated region
    $region30: #{tpu_custom_call.1} parent=1 // pred_check
      _
    $region31: #{tpu_custom_call.1} parent=1 // pred_check_branch
      %147 = sbr.rel (0) target = $region33
    $region32: #{tpu_custom_call.1} parent=1 // pred_region
      %149 = vsyncadd [#allocation9], 0
      %s151 = sshll.u32 [#allocation8], 4
      %s152 = int_to_ptr.vmem [resolvable:$true] %s151
      %s153 = sshll.u32 %s4, 4
      %s154 = int_to_ptr.hbm [resolvable:$true] %s153
      %156 = dma.vmem_to_hbm [thread:$0]  %s152, 16, %s154, [#allocation9]
    $region33: #{tpu_custom_call.1} parent=1 // pred_fallthru
      _
    // Predicated region
    $region34: #{tpu_custom_call.1} parent=1 // pred_check
      _
    $region35: #{tpu_custom_call.1} parent=1 // pred_check_branch
      %158 = sbr.rel (0) target = $region37
    $region36: #{tpu_custom_call.1} parent=1 // pred_region
      %160 = dma.done [#allocation4], 16
    $region37: #{tpu_custom_call.1} parent=1 // pred_fallthru
      _
    // Predicated region
    $region38: #{tpu_custom_call.1} parent=1 // pred_check
      _
    $region39: #{tpu_custom_call.1} parent=1 // pred_check_branch
      %162 = sbr.rel (0) target = $region41
    $region40: #{tpu_custom_call.1} parent=1 // pred_region
      %164 = dma.done [#allocation9], 16
    $region41: #{tpu_custom_call.1} parent=1 // pred_fallthru
      _
    %165 = vsyncpa [#allocation3], 1
    %166 = vsyncpa [#allocation6], 1
    %167 = vsyncpa [#allocation4], 1
    %168 = vsyncpa [#allocation9], 1

</llo_original>
